<compile_context>
chip_gen: v7x
topology: tpu7x:2x2x1
jax: 0.10.0
libtpu: 0.0.40
codegen_flags: <defaults>
</compile_context>

<pallas_src>
import jax
import jax.numpy as jnp
from jax.experimental import pallas as pl
from jax.experimental.pallas import tpu as pltpu

EPS = 1e-6


# ---------------------------------------------------------------------------
# Kernel
# ---------------------------------------------------------------------------
def layernorm_kernel(alpha_ref, bias_ref, x_ref, o_ref):
    """alpha_ref/bias_ref: (1,) scalars in SMEM.  x_ref/o_ref: (block_rows, H)."""
    x = x_ref[...].astype(jnp.float32)
    h = x.shape[-1]

    # Two-pass, numerically stable variance (torch.std default: unbiased, ddof=1).
    mean = jnp.sum(x, axis=-1, keepdims=True) * (1.0 / h)
    diff = x - mean
    var = jnp.sum(diff * diff, axis=-1, keepdims=True) * (1.0 / (h - 1))
    std = jnp.sqrt(var)

    # Per-row scale: one reciprocal per row, then one fused mul-add per element.
    inv = alpha_ref[0] * pl.reciprocal(std + EPS, approx=False)
    o_ref[...] = (diff * inv + bias_ref[0]).astype(o_ref.dtype)


# ---------------------------------------------------------------------------
# Tile-size / VMEM selection
# ---------------------------------------------------------------------------
def _vmem_capacity_bytes():
    try:
        return int(pltpu.get_tpu_info().vmem_capacity_bytes)
    except Exception:
        return 64 * 1024 * 1024  # conservative (v7x-sized) fallback


def _round_up(n, m):
    return ((n + m - 1) // m) * m


def _bytes_per_row(H, itemsize):
    # Live VMEM per row of tile: 2 double-buffered input tiles + 2 output tiles
    # (auto-pipelining) + ~2 f32 tile-sized temporaries in the kernel body.
    return H * (4 * itemsize + 2 * 4)


def _choose_block_rows(R, H, dtype, vmem_cap):
    """Byte-targeted row tile, bounded by VMEM and clamped to >=2 grid steps."""
    itemsize = jnp.dtype(dtype).itemsize
    align = 16 if itemsize < 4 else 8
    bpr = _bytes_per_row(H, itemsize)

    budget = min(int(vmem_cap * 3 // 4), 100 * 1024 * 1024)
    rows_budget = budget // bpr
    if rows_budget < align:
        # TODO(synk): add an H-tiling path for extremely wide rows.
        raise ValueError(
            f"Hidden dim {H} too large for a single {align}-row block within "
            f"the VMEM budget ({budget} bytes).")

    # Byte-targeted input tile: ~8 MiB; push to ~12 MiB on v7x-class chips
    # (64 MiB VMEM/TC but ~3.2 TB/s HBM -> fixed per-step overhead matters more).
    if vmem_cap <= 64 * 1024 * 1024:
        target_in_bytes = 12 * 1024 * 1024
    else:
        target_in_bytes = 8 * 1024 * 1024
    rows_target = max(align, target_in_bytes // (H * itemsize))

    block_rows = min(rows_target, rows_budget)
    block_rows = max(align, (block_rows // align) * align)

    # Never bigger than the (alignment-rounded) number of rows we actually have.
    block_rows = min(block_rows, _round_up(R, align))

    # Guarantee >= 2 grid steps (keeps both v7x TensorCores busy and gives the
    # double-buffered pipeline something to overlap) ...
    block_rows = min(block_rows, max(align, _round_up(pl.cdiv(R, 2), align)))
    # ... and prefer >= 4 steps as long as the tile stays >= ~2 MiB.
    four_cap = max(align, _round_up(pl.cdiv(R, 4), align))
    if four_cap * H * itemsize >= 2 * 1024 * 1024:
        block_rows = min(block_rows, four_cap)

    return block_rows


# ---------------------------------------------------------------------------
# Wrapper
# ---------------------------------------------------------------------------
def layer_normalization(x, alpha, bias, *, block_rows=None):
    """x: (..., H). alpha, bias: shape (1,) scalar params."""
    orig_shape = x.shape
    H = orig_shape[-1]
    if H < 2:
        raise ValueError("LayerNormalization needs H >= 2 (unbiased std uses H-1).")

    x2d = x.reshape(-1, H)
    R = x2d.shape[0]
    itemsize = jnp.dtype(x.dtype).itemsize

    alpha = jnp.asarray(alpha, jnp.float32).reshape((1,))
    bias = jnp.asarray(bias, jnp.float32).reshape((1,))

    vmem_cap = _vmem_capacity_bytes()
    if block_rows is None:
        block_rows = _choose_block_rows(R, H, x.dtype, vmem_cap)

    # Tight scoped-VMEM request: actual footprint + headroom (not 48-96 MiB),
    # so surrounding XLA fusions keep their VMEM, especially on 64 MiB/TC v7x.
    footprint = block_rows * _bytes_per_row(H, itemsize)
    vmem_limit = int(min(vmem_cap, max(footprint * 3 // 2, 16 * 1024 * 1024)))

    grid = (pl.cdiv(R, block_rows),)  # no padded copy; boundary stores are masked

    out2d = pl.pallas_call(
        layernorm_kernel,
        out_shape=jax.ShapeDtypeStruct((R, H), x.dtype),
        grid_spec=pltpu.PrefetchScalarGridSpec(
            num_scalar_prefetch=0,
            grid=grid,
            in_specs=[
                pl.BlockSpec(memory_space=pltpu.SMEM),  # alpha
                pl.BlockSpec(memory_space=pltpu.SMEM),  # bias
                pl.BlockSpec((block_rows, H), lambda i: (i, 0)),
            ],
            out_specs=pl.BlockSpec((block_rows, H), lambda i: (i, 0)),
        ),
        compiler_params=pltpu.CompilerParams(
            dimension_semantics=("parallel",),  # lets v7x shard rows over 2 TCs
            vmem_limit_bytes=vmem_limit,
        ),
    )(alpha, bias, x2d)

    return out2d.reshape(orig_shape)


def decoder_forward(x, encoder_output, src_mask, tgt_mask, *, layers=(),
                    alpha=None, bias=None):
    """Decoder.forward: run the (caller-supplied) layers, then LayerNorm."""
    # TODO(synk): the DecoderBlock layers are not defined in the reference spec;
    # any JAX callables passed via `layers` are applied as-is.
    for layer in layers:
        x = layer(x, encoder_output, src_mask, tgt_mask)
    if alpha is None:
        alpha = jnp.ones((1,), dtype=jnp.float32)
    if bias is None:
        bias = jnp.zeros((1,), dtype=jnp.float32)
    return layer_normalization(x, alpha, bias)


# ---------------------------------------------------------------------------
# Reference (pure JAX) and demo
# ---------------------------------------------------------------------------
def reference_layernorm(x, alpha, bias):
    mean = jnp.mean(x, axis=-1, keepdims=True)
    std = jnp.sqrt(jnp.var(x, axis=-1, keepdims=True, ddof=1))
    return alpha[0] * (x - mean) / (std + EPS) + bias[0]


if __name__ == "__main__":
    key = jax.random.PRNGKey(0)
    # Small but lane-dense shapes: d_model = 512 (multiple of 128) keeps output
    # stores unmasked; total data is still tiny (2*8*512 f32).
    batch, seq, hidden = 2, 8, 512
    k1, k2 = jax.random.split(key)

    x = jax.random.normal(k1, (batch, seq, hidden), dtype=jnp.float32)
    # Make the mean non-trivial so the two-pass variance path is exercised.
    x = x * 0.5 + 3.0
    encoder_output = jax.random.normal(k2, (batch, seq, hidden), dtype=jnp.float32)
    src_mask = jnp.ones((batch, 1, 1, seq), dtype=jnp.float32)
    tgt_mask = jnp.tril(jnp.ones((seq, seq), dtype=jnp.float32))[None, None, :, :]

    # nn.Parameter(torch.ones(1)) / nn.Parameter(torch.zeros(1))
    alpha = jnp.ones((1,), dtype=jnp.float32)
    bias = jnp.zeros((1,), dtype=jnp.float32)

    out = decoder_forward(x, encoder_output, src_mask, tgt_mask,
                          layers=(), alpha=alpha, bias=bias)
    out = jax.block_until_ready(out)

    ref = reference_layernorm(x, alpha, bias)
    assert out.shape == x.shape
    assert jnp.allclose(out, ref, atol=1e-4, rtol=1e-4), "mismatch vs reference"

    print("KERNEL_OK")
</pallas_src>

<mosaic_0001>
module attributes {stable_mosaic.version = 11 : i64} {
  func.func @layernorm_kernel(%arg0: i32, %arg1: memref<1xf32, #tpu.memory_space<smem>>, %arg2: memref<1xf32, #tpu.memory_space<smem>>, %arg3: memref<8x512xf32, #tpu.memory_space<vmem>>, %arg4: memref<8x512xf32, #tpu.memory_space<vmem>>) attributes {dimension_semantics = [#tpu.dimension_semantics<parallel>], iteration_bounds = array<i64: 2>, scalar_prefetch = 0 : i64, scratch_operands = 0 : i64, tpu.core_type = #tpu.core_type<tc>, window_params = [{transform_indices = @transform_0, window_bounds = array<i64: 1>}, {transform_indices = @transform_1, window_bounds = array<i64: 1>}, {transform_indices = @transform_2, window_bounds = array<i64: 8, 512>}, {transform_indices = @transform_3, window_bounds = array<i64: 8, 512>}]} {
    %c0 = arith.constant 0 : index
    %c0_0 = arith.constant 0 : index
    %0 = vector.load %arg3[%c0, %c0_0] : memref<8x512xf32, #tpu.memory_space<vmem>>, vector<8x512xf32>
    %cst = arith.constant dense<0.000000e+00> : vector<8xf32>
    %1 = vector.multi_reduction <add>, %0, %cst [1] : vector<8x512xf32> to vector<8xf32>
    %2 = vector.shape_cast %1 : vector<8xf32> to vector<8x1xf32>
    %cst_1 = arith.constant 0.001953125 : f32
    %3 = vector.broadcast %cst_1 : f32 to vector<8x1xf32>
    %4 = arith.mulf %2, %3 : vector<8x1xf32>
    %5 = vector.broadcast %4 : vector<8x1xf32> to vector<8x512xf32>
    %6 = arith.subf %0, %5 : vector<8x512xf32>
    %7 = arith.mulf %6, %6 : vector<8x512xf32>
    %cst_2 = arith.constant dense<0.000000e+00> : vector<8xf32>
    %8 = vector.multi_reduction <add>, %7, %cst_2 [1] : vector<8x512xf32> to vector<8xf32>
    %9 = vector.shape_cast %8 : vector<8xf32> to vector<8x1xf32>
    %cst_3 = arith.constant 0.00195694715 : f32
    %10 = vector.broadcast %cst_3 : f32 to vector<8x1xf32>
    %11 = arith.mulf %9, %10 : vector<8x1xf32>
    %12 = math.sqrt %11 : vector<8x1xf32>
    %c0_4 = arith.constant 0 : index
    %13 = memref.load %arg1[%c0_4] : memref<1xf32, #tpu.memory_space<smem>>
    %cst_5 = arith.constant 9.99999997E-7 : f32
    %14 = vector.broadcast %cst_5 : f32 to vector<8x1xf32>
    %15 = arith.addf %12, %14 : vector<8x1xf32>
    %16 = tpu.reciprocal %15 : vector<8x1xf32> -> vector<8x1xf32>
    %17 = vector.broadcast %13 : f32 to vector<8x1xf32>
    %18 = arith.mulf %17, %16 : vector<8x1xf32>
    %19 = vector.broadcast %18 : vector<8x1xf32> to vector<8x512xf32>
    %20 = arith.mulf %6, %19 : vector<8x512xf32>
    %c0_6 = arith.constant 0 : index
    %21 = memref.load %arg2[%c0_6] : memref<1xf32, #tpu.memory_space<smem>>
    %22 = vector.broadcast %21 : f32 to vector<8x512xf32>
    %23 = arith.addf %20, %22 : vector<8x512xf32>
    %c0_7 = arith.constant 0 : index
    %c0_8 = arith.constant 0 : index
    %24 = vector.load %arg4[%c0_7, %c0_8] : memref<8x512xf32, #tpu.memory_space<vmem>>, vector<8x512xf32>
    tpu.vector_store %arg4[%c0_7, %c0_8], %23 {strides = array<i32>} : memref<8x512xf32, #tpu.memory_space<vmem>>, vector<8x512xf32>,
    return
  }
  func.func @transform_0(%arg0: i32) -> i32 {
    %c0_i32 = arith.constant 0 : i32
    %c0_i32_0 = arith.constant 0 : i32
    return %c0_i32 : i32
  }
  func.func @transform_1(%arg0: i32) -> i32 {
    %c0_i32 = arith.constant 0 : i32
    %c0_i32_0 = arith.constant 0 : i32
    return %c0_i32 : i32
  }
  func.func @transform_2(%arg0: i32) -> (i32, i32) {
    %c0_i32 = arith.constant 0 : i32
    %c0_i32_0 = arith.constant 0 : i32
    return %arg0, %c0_i32 : i32, i32
  }
  func.func @transform_3(%arg0: i32) -> (i32, i32) {
    %c0_i32 = arith.constant 0 : i32
    %c0_i32_0 = arith.constant 0 : i32
    return %arg0, %c0_i32 : i32, i32
  }
}

</mosaic_0001>

<llo_original>
// kernel: tpu_custom_call.1
$region0: #{tpu_custom_call.1}
  #allocation0 [shape = 'u32[]', space=smem, size = 0x4, offset = 0x4, fixed_abs, tag = 'smem constant byte address 0x4 - core index']
  #allocation1 [shape = 'u32[144,128]{1,0:T(1,128)}', space=vmem, size = 0x12000, scoped, tag = 'internal scratch']
  #allocation2 [shape = 'f32[1]{0:T(128)S(6)}', space=smem, size = 0x200, scoped, tag = 'scoped memory for tpu_custom_call.1']
  #allocation3 [shape = 'f32[1]{0:T(128)S(6)}', space=smem, size = 0x200, scoped, tag = 'scoped memory for tpu_custom_call.1']
  %s0 = inlined_call_operand.<no memory space> [shape: f32[1], index: 0, kind: input, shape index: {}]
  %s1 = inlined_call_operand.<no memory space> [shape: f32[1], index: 1, kind: input, shape index: {}]
  %s2 = inlined_call_operand.hbm [shape: f32[16,512], index: 2, kind: input, shape index: {}]
  %s3 = inlined_call_operand.hbm [shape: f32[16,512], index: 3, kind: output, shape index: {}]
  %s4 = sld [smem:[#allocation0]]
  $region49: #{tpu_custom_call.1} parent=0
    _
  %s6 = ssub.s32 1, %s4
  %s7 = scalar_select 0, %s6, %s4
  %8 = sst [smem:[#allocation2]] %s0
  %9 = sst [smem:[#allocation3]] %s1
  $region1: #{tpu_custom_call.1} parent=0
    #allocation4 [shape = 'u8[32768]{0}', space=vmem, size = 0x8000, scoped, tag = 'input window, operand 2']
    #allocation5 [shape = 's32[2]{0}', space=sflag, size = 0x8, scoped, tag = 'scoped memory for tpu_custom_call.1']
    #allocation6 [shape = 's32[2]{0}', space=sflag, size = 0x8, scoped, tag = 'scoped memory for tpu_custom_call.1']
    #allocation7 [shape = 'u8[32768]{0}', space=vmem, size = 0x8000, scoped, tag = 'output window, operand 0']
    %10 = vsyncpa [#allocation5], 0
    %s11 = scalar_lea.sflag [#allocation5], 1
    %12 = vsyncpa %s11, 0
    %13 = vsyncpa [#allocation6], 0
    %s14 = scalar_lea.sflag [#allocation6], 1
    %15 = vsyncpa %s14, 0
    loop: start=0, step=1, limit=4
    $region2: #{tpu_custom_call.1} parent=1 // loop_pre_header
      _
    $region3: #{tpu_custom_call.1} parent=1 // loop_header
      %s17 = sphi 0, %s21
      %p18 = scmp.ge.s32.totalorder %s17, 4
      %s25 = sphi 0, %s25
      %s27 = sphi 0, %s25
      %s28 = sphi 0, %s27
      %s42 = sphi 0, %s28
      %s46 = sphi 0, %s46
      %s48 = sphi 0, %s46
      %s49 = sphi 0, %s48
      %s63 = sphi 0, %s49
      %s69 = sphi 0, %s71
      %s72 = sphi 0, %s69
      %s73 = sphi 0, %s72
      %s89 = sphi 0, %s73
      %s95 = sphi 0, %s97
      %s98 = sphi 0, %s95
      %s99 = sphi 0, %s98
      %s115 = sphi 0, %s99
    $region4: #{tpu_custom_call.1} parent=1 // loop_header_branch
      %20 = sbr.rel (%p18) target = $region8
    $region5: #{tpu_custom_call.1} parent=1 // loop_body
      %s22 = ssub.s32 %s17, 1
      %s23 = ssub.s32 %s17, 2
      %s24 = sadd.s32 %s17, 1
      %s26 = sadd.s32 %s25, 1
      %p29 = scmp.eq.s32.totalorder %s17, 1
      %p30 = scmp.ne.s32.totalorder %s25, %s27
      %p31 = scmp.eq.s32.totalorder %s17, 0
      %p32 = por %p30, %p31
      %p33 = scmp.ne.s32.totalorder %s25, %s27
      %p34 = scmp.eq.s32.totalorder %s22, 1
      %p35 = por %p33, %p34
      %p36 = scmp.ne.s32.totalorder %s27, %s28
      %p37 = scmp.eq.s32.totalorder %s22, 0
      %p38 = por %p36, %p37
      %p39 = scmp.ne.s32.totalorder %s27, %s28
      %p40 = scmp.eq.s32.totalorder %s23, 1
      %p41 = por %p39, %p40
      %p43 = scmp.ne.s32.totalorder %s28, %s42
      %p44 = scmp.eq.s32.totalorder %s23, 0
      %p45 = por %p43, %p44
      %s47 = sadd.s32 %s46, 1
      %p50 = scmp.eq.s32.totalorder %s17, 1
      %p51 = scmp.ne.s32.totalorder %s46, %s48
      %p52 = scmp.eq.s32.totalorder %s17, 0
      %p53 = por %p51, %p52
      %p54 = scmp.ne.s32.totalorder %s46, %s48
      %p55 = scmp.eq.s32.totalorder %s22, 1
      %p56 = por %p54, %p55
      %p57 = scmp.ne.s32.totalorder %s48, %s49
      %p58 = scmp.eq.s32.totalorder %s22, 0
      %p59 = por %p57, %p58
      %p60 = scmp.ne.s32.totalorder %s48, %s49
      %p61 = scmp.eq.s32.totalorder %s23, 1
      %p62 = por %p60, %p61
      %p64 = scmp.ne.s32.totalorder %s49, %s63
      %p65 = scmp.eq.s32.totalorder %s23, 0
      %p66 = por %p64, %p65
      %s67 = ssub.s32 %s17, %s24
      %p68 = scmp.eq.s32.totalorder %s67, 0
      %s70 = sadd.s32 %s69, 1
      %s71 = scalar_select %p68, %s69, %s70
      %p74 = pneg %p68
      %p75 = scmp.eq.s32.totalorder %s17, 1
      %p76 = por %p74, %p75
      %p77 = scmp.ne.s32.totalorder %s69, %s72
      %p78 = scmp.eq.s32.totalorder %s17, 0
      %p79 = por %p77, %p78
      %p80 = scmp.ne.s32.totalorder %s69, %s72
      %p81 = scmp.eq.s32.totalorder %s22, 1
      %p82 = por %p80, %p81
      %p83 = scmp.ne.s32.totalorder %s72, %s73
      %p84 = scmp.eq.s32.totalorder %s22, 0
      %p85 = por %p83, %p84
      %p86 = scmp.ne.s32.totalorder %s72, %s73
      %p87 = scmp.eq.s32.totalorder %s23, 1
      %p88 = por %p86, %p87
      %p90 = scmp.ne.s32.totalorder %s73, %s89
      %p91 = scmp.eq.s32.totalorder %s23, 0
      %p92 = por %p90, %p91
      %s93 = ssub.s32 %s17, %s24
      %p94 = scmp.eq.s32.totalorder %s93, 0
      %s96 = sadd.s32 %s95, 1
      %s97 = scalar_select %p94, %s95, %s96
      %p100 = pneg %p94
      %p101 = scmp.eq.s32.totalorder %s17, 1
      %p102 = por %p100, %p101
      %p103 = scmp.ne.s32.totalorder %s95, %s98
      %p104 = scmp.eq.s32.totalorder %s17, 0
      %p105 = por %p103, %p104
      %p106 = scmp.ne.s32.totalorder %s95, %s98
      %p107 = scmp.eq.s32.totalorder %s22, 1
      %p108 = por %p106, %p107
      %p109 = scmp.ne.s32.totalorder %s98, %s99
      %p110 = scmp.eq.s32.totalorder %s22, 0
      %p111 = por %p109, %p110
      %p112 = scmp.ne.s32.totalorder %s98, %s99
      %p113 = scmp.eq.s32.totalorder %s23, 1
      %p114 = por %p112, %p113
      %p116 = scmp.ne.s32.totalorder %s99, %s115
      %p117 = scmp.eq.s32.totalorder %s23, 0
      %p118 = por %p116, %p117
      %p119 = scmp.le.s32.totalorder 1, %s17
      %p120 = scmp.lt.s32.totalorder %s17, 3
      %p121 = pnand %p119, %p120
      %p122 = pneg %p121
      // Predicated region
      $region9: #{tpu_custom_call.1} parent=5 // pred_check
        _
      $region10: #{tpu_custom_call.1} parent=5 // pred_check_branch
        %124 = sbr.rel (%p121) target = $region12
      $region11: #{tpu_custom_call.1} parent=5 // pred_region
        %s125 = ssub.s32 %s17, 1
        // Predicated region
        $region13: #{tpu_custom_call.1} parent=11 // pred_check
          %p126 = pneg %p38
        $region14: #{tpu_custom_call.1} parent=11 // pred_check_branch
          %128 = sbr.rel (%p126) target = $region16
        $region15: #{tpu_custom_call.1} parent=11 // pred_region
          _
        $region16: #{tpu_custom_call.1} parent=11 // pred_fallthru
          _
        // Predicated region
        $region17: #{tpu_custom_call.1} parent=11 // pred_check
          %p129 = pneg %p59
        $region18: #{tpu_custom_call.1} parent=11 // pred_check_branch
          %131 = sbr.rel (%p129) target = $region20
        $region19: #{tpu_custom_call.1} parent=11 // pred_region
          _
        $region20: #{tpu_custom_call.1} parent=11 // pred_fallthru
          _
      $region12: #{tpu_custom_call.1} parent=5 // pred_fallthru
        _
      %p132 = scmp.lt.s32.totalorder %s17, 2
      // Predicated region
      $region21: #{tpu_custom_call.1} parent=5 // pred_check
        %p133 = pneg %p132
      $region22: #{tpu_custom_call.1} parent=5 // pred_check_branch
        %135 = sbr.rel (%p133) target = $region24
      $region23: #{tpu_custom_call.1} parent=5 // pred_region
        // Predicated region
        $region25: #{tpu_custom_call.1} parent=23 // pred_check
          %p136 = pneg %p79
        $region26: #{tpu_custom_call.1} parent=23 // pred_check_branch
          %138 = sbr.rel (%p136) target = $region28
        $region27: #{tpu_custom_call.1} parent=23 // pred_region
          %s139 = sand.u32 %s69, 1
          %s140 = scalar_lea.sflag [#allocation5], %s139
          %s141 = sand.u32 %s69, 1
          %s142 = smul.addr %s141, 32
          %s143 = scalar_lea.vmem [#allocation4], %s142
          %s145 = ssub.s32 512, 512
          %146 = vsyncadd %s140, %s145
          %s147 = smul.addr %s17, 4
          %s148 = smul.addr %s147, 128
          %s149 = scalar_lea.hbm %s2, %s148
          %s151 = sshll.u32 %s143, 4
          %s152 = int_to_ptr.vmem [resolvable:$true] %s151
          %154 = dma.hbm_to_vmem [thread:$0]  %s149, 512, %s152, %s140
        $region28: #{tpu_custom_call.1} parent=23 // pred_fallthru
          _
      $region24: #{tpu_custom_call.1} parent=5 // pred_fallthru
        _
      %p155 = scmp.le.s32.totalorder 1, %s17
      %p156 = scmp.lt.s32.totalorder %s17, 3
      %p157 = pnand %p155, %p156
      %p158 = pneg %p157
      // Predicated region
      $region29: #{tpu_custom_call.1} parent=5 // pred_check
        _
      $region30: #{tpu_custom_call.1} parent=5 // pred_check_branch
        %160 = sbr.rel (%p157) target = $region32
      $region31: #{tpu_custom_call.1} parent=5 // pred_region
        %s161 = ssub.s32 %s17, 1
        %s162 = sand.u32 %s72, 1
        %s163 = scalar_lea.sflag [#allocation5], %s162
        %s164 = sand.u32 %s72, 1
        %s165 = smul.addr %s164, 32
        %s166 = scalar_lea.vmem [#allocation4], %s165
        // Predicated region
        $region33: #{tpu_custom_call.1} parent=31 // pred_check
          %p167 = pneg %p85
        $region34: #{tpu_custom_call.1} parent=31 // pred_check_branch
          %169 = sbr.rel (%p167) target = $region36
        $region35: #{tpu_custom_call.1} parent=31 // pred_region
          %170 = dma.done %s163, 512
        $region36: #{tpu_custom_call.1} parent=31 // pred_fallthru
          _
        %p171 = pneg %p38
        %p172 = pneg %p35
        %p173 = pneg %p59
        %p174 = pneg %p56
        %s175 = sand.u32 %s72, 1
        %s176 = scalar_lea.sflag [#allocation5], %s175
        %s177 = sand.u32 %s72, 1
        %s178 = smul.addr %s177, 32
        %s179 = scalar_lea.vmem [#allocation4], %s178
        %p180 = pneg %p85
        %p181 = pneg %p82
        %p182 = pneg %p111
        %p183 = pneg %p108
        %s184 = sand.u32 %s98, 1
        %s185 = scalar_lea.sflag [#allocation6], %s184
        %s186 = sand.u32 %s98, 1
        %s187 = smul.addr %s186, 32
        %s188 = scalar_lea.vmem [#allocation7], %s187
        %v189 = vld [vmem:[%s166] sm:$0xff]
        %v190 = vld [vmem:[%s166 + $0x8] sm:$0xff]
        %v191 = vld [vmem:[%s166 + $0x10] sm:$0xff]
        %v192 = vld [vmem:[%s166 + $0x18] sm:$0xff]
        %v193 = vadd.f32 %v189, %v190
        %v194 = vadd.f32 %v193, %v191
        %v195 = vadd.f32 %v194, %v192
        %196 = vadd.xlane.f32.xlu0 %v195
        %v197 = vpop.xlane.xlu0 %196
        %v198 = vmul.f32 %v197, 0.001953125
        %v199 = vsub.f32 %v189, %v198
        %v200 = vsub.f32 %v190, %v198
        %v201 = vsub.f32 %v191, %v198
        %v202 = vsub.f32 %v192, %v198
        %v203 = vmul.f32 %v199, %v199
        %v204 = vmul.f32 %v200, %v200
        %v205 = vmul.f32 %v201, %v201
        %v206 = vmul.f32 %v202, %v202
        %v207 = vadd.f32 %v203, %v204
        %v208 = vadd.f32 %v207, %v205
        %v209 = vadd.f32 %v208, %v206
        %210 = vadd.xlane.f32.xlu0 %v209
        %v211 = vpop.xlane.xlu0 %210
        %v212 = vmul.f32 %v211, 0.0019569471
        %v213 = vrsqrt.pop %v212
        %v214 = vmul.f32 %v212, %v213
        %vm215 = vcmp.eq.f32.partialorder %v212, inf
        %v216 = vsel %vm215, %v212, %v214
        %vm217 = vcmp.eq.f32.partialorder %v212, 0.0
        %v218 = vand.u32 %v212, 2147483648
        %v219 = vsel %vm217, %v218, %v216
        %s220 = sld [smem:[#allocation2]]
        %v221 = vadd.f32 %v219, 1e-06
        %v222 = vrcp.pop %v221
        %v223 = vstv %s220
        %v224 = vmul.f32 %v223, %v222
        %v225 = vmul.f32 %v199, %v224
        %v226 = vmul.f32 %v200, %v224
        %v227 = vmul.f32 %v201, %v224
        %v228 = vmul.f32 %v202, %v224
        %s229 = sld [smem:[#allocation3]]
        %v230 = vstv %s229
        %v231 = vadd.f32 %v225, %v230
        %v232 = vadd.f32 %v226, %v230
        %v233 = vadd.f32 %v227, %v230
        %v234 = vadd.f32 %v228, %v230
        %235 = vst [vmem:[%s188] sm:$0xff] %v231
        %236 = vst [vmem:[%s188 + $0x8] sm:$0xff] %v232
        %237 = vst [vmem:[%s188 + $0x10] sm:$0xff] %v233
        %238 = vst [vmem:[%s188 + $0x18] sm:$0xff] %v234
        %s239 = sand.u32 %s98, 1
        %s240 = scalar_lea.sflag [#allocation6], %s239
        %s241 = sand.u32 %s98, 1
        %s242 = smul.addr %s241, 32
        %s243 = scalar_lea.vmem [#allocation7], %s242
        // Predicated region
        $region37: #{tpu_custom_call.1} parent=31 // pred_check
          %p244 = pneg %p108
        $region38: #{tpu_custom_call.1} parent=31 // pred_check_branch
          %246 = sbr.rel (%p244) target = $region40
        $region39: #{tpu_custom_call.1} parent=31 // pred_region
          %s248 = ssub.s32 512, 512
          %249 = vsyncadd %s240, %s248
          %s250 = smul.addr %s22, 4
          %s251 = smul.addr %s250, 128
          %s252 = scalar_lea.hbm %s3, %s251
          %s254 = sshll.u32 %s243, 4
          %s255 = int_to_ptr.vmem [resolvable:$true] %s254
          %257 = dma.vmem_to_hbm [thread:$0]  %s255, 512, %s252, %s240
        $region40: #{tpu_custom_call.1} parent=31 // pred_fallthru
          _
      $region32: #{tpu_custom_call.1} parent=5 // pred_fallthru
        _
      %p258 = scmp.le.s32.totalorder 2, %s17
      // Predicated region
      $region41: #{tpu_custom_call.1} parent=5 // pred_check
        %p259 = pneg %p258
      $region42: #{tpu_custom_call.1} parent=5 // pred_check_branch
        %261 = sbr.rel (%p259) target = $region44
      $region43: #{tpu_custom_call.1} parent=5 // pred_region
        %s262 = ssub.s32 %s17, 2
        // Predicated region
        $region45: #{tpu_custom_call.1} parent=43 // pred_check
          %p263 = pneg %p114
        $region46: #{tpu_custom_call.1} parent=43 // pred_check_branch
          %265 = sbr.rel (%p263) target = $region48
        $region47: #{tpu_custom_call.1} parent=43 // pred_region
          %s266 = sand.u32 %s99, 1
          %s267 = scalar_lea.sflag [#allocation6], %s266
          %s268 = sand.u32 %s99, 1
          %s269 = smul.addr %s268, 32
          %s270 = scalar_lea.vmem [#allocation7], %s269
          %271 = dma.done %s267, 512
        $region48: #{tpu_custom_call.1} parent=43 // pred_fallthru
          _
      $region44: #{tpu_custom_call.1} parent=5 // pred_fallthru
        _
    $region6: #{tpu_custom_call.1} parent=1 // loop_footer
      %s21 = sadd.s32 1, %s17
    $region7: #{tpu_custom_call.1} parent=1 // loop_footer_branch
      %16 = sbr.rel target = $region3
    $region8: #{tpu_custom_call.1} parent=1 // loop_exit
      _
    %272 = vsyncpa [#allocation5], 1
    %s273 = scalar_lea.sflag [#allocation5], 1
    %274 = vsyncpa %s273, 1
    %275 = vsyncpa [#allocation6], 1
    %s276 = scalar_lea.sflag [#allocation6], 1
    %277 = vsyncpa %s276, 1

</llo_original>
